<compile_context>
chip_gen: v5e
topology: v5e:2x2
jax: 0.10.0
libtpu: 0.0.40
codegen_flags: <defaults>
</compile_context>

<pallas_src>
import functools

import jax
import jax.numpy as jnp
from jax import lax
from jax.experimental import pallas as pl
from jax.experimental.pallas import tpu as pltpu

_SMALL_TABLE_BYTES = 8 * 1024 * 1024    # whole-table-in-VMEM threshold (v7x-safe)
_VMEM_BUDGET_BYTES = 20 * 1024 * 1024   # stay under the 32 MiB scoped VMEM limit
_MAX_TOKENS_PER_TILE = 1024
_LN_EPS = 1e-5


def _layernorm_store(x, gamma_ref, beta_ref, out_ref, eps):
    """Two-pass LayerNorm over the last dim of x, fused scale/shift + store."""
    mean = jnp.mean(x, axis=-1, keepdims=True)
    xc = x - mean
    var = jnp.mean(xc * xc, axis=-1, keepdims=True)
    y = xc * lax.rsqrt(var + eps)
    out_ref[...] = (y * gamma_ref[...] + beta_ref[...]).astype(out_ref.dtype)


# ---------------------------------------------------------------------------
# Fast path: token table resident in VMEM, gather = dynamic VMEM row loads.
# ---------------------------------------------------------------------------
def _embedding_kernel_vmem(ids_ref, tok_ref, pos_ref, gamma_ref, beta_ref,
                           out_ref, tok_buf, *, tokens_per_tile, eps):
    """One grid step = `tokens_per_tile` consecutive tokens of the flattened
    (padded) token stream.

      ids_ref   : SMEM (N_pad,) int32   scalar-prefetched token ids
      tok_ref   : VMEM (V, D)           whole token table, resident
      pos_ref   : VMEM (T, D)           positional rows for this tile
      gamma_ref : VMEM (1, D)
      beta_ref  : VMEM (1, D)
      out_ref   : VMEM (T, D)
      tok_buf   : VMEM (T, D) scratch   gathered token rows
    """
    i = pl.program_id(0)
    base = i * tokens_per_tile

    def gather(t, carry):
        idx = ids_ref[base + t]                              # token id (SMEM)
        tok_buf[pl.ds(t, 1), :] = tok_ref[pl.ds(idx, 1), :]  # VMEM row gather
        return carry

    lax.fori_loop(0, tokens_per_tile, gather, 0)

    x = tok_buf[...].astype(jnp.float32) + pos_ref[...].astype(jnp.float32)
    _layernorm_store(x, gamma_ref, beta_ref, out_ref, eps)


# ---------------------------------------------------------------------------
# Large-vocab path: table in HBM, per-row DMA gather, double-buffered across
# grid steps, one bulk semaphore wait per tile.
# ---------------------------------------------------------------------------
def _embedding_kernel_hbm(ids_ref, tok_hbm, pos_ref, gamma_ref, beta_ref,
                          out_ref, tok_buf, sem, *, tokens_per_tile, eps):
    """tok_buf : VMEM (2, T, D) double buffer; sem : DMA semaphores (2,).
    Requires dimension_semantics=("arbitrary",) — the prefetch state in
    scratch assumes in-order grid execution on a single core."""
    i = pl.program_id(0)
    n_tiles = pl.num_programs(0)
    slot = i % 2

    def issue_tile(tile_idx, dst_slot):
        base = tile_idx * tokens_per_tile

        def body(t, carry):
            idx = ids_ref[base + t]
            pltpu.make_async_copy(
                tok_hbm.at[pl.ds(idx, 1)],
                tok_buf.at[dst_slot, pl.ds(t, 1)],
                sem.at[dst_slot],
            ).start()
            return carry

        lax.fori_loop(0, tokens_per_tile, body, 0)

    # Prime the pipeline on the very first grid step.
    @pl.when(i == 0)
    def _prime():
        issue_tile(0, 0)

    # Prefetch the next tile's rows; they land while this tile is computed.
    @pl.when(i + 1 < n_tiles)
    def _prefetch():
        issue_tile(i + 1, 1 - slot)

    # Single bulk wait: T row copies of (1, D) == one (T, D) descriptor's bytes.
    pltpu.make_async_copy(
        tok_hbm.at[pl.ds(0, tokens_per_tile)],
        tok_buf.at[slot],
        sem.at[slot],
    ).wait()

    x = tok_buf[slot].astype(jnp.float32) + pos_ref[...].astype(jnp.float32)
    _layernorm_store(x, gamma_ref, beta_ref, out_ref, eps)


# ---------------------------------------------------------------------------
# Wrapper
# ---------------------------------------------------------------------------
def _round_up(x, m):
    return (x + m - 1) // m * m


def _pick_tokens_per_tile(n_tokens, d_model, resident_bytes, bufs_per_token):
    """Largest multiple-of-8 tile that fits the VMEM budget (<= 1024 tokens)."""
    avail = max(_VMEM_BUDGET_BYTES - resident_bytes, 1 << 20)
    per_token = bufs_per_token * d_model * 4          # f32 working set per token
    t = min(_MAX_TOKENS_PER_TILE, avail // per_token, _round_up(n_tokens, 8))
    return max(8, (int(t) // 8) * 8)


def embedding_forward(x, tok_table, pos_table, gamma, beta, *, eps=_LN_EPS):
    B, S = x.shape
    V, D = tok_table.shape
    L = pos_table.shape[0]
    assert S <= L, "sequence longer than positional table"

    N = B * S
    table_bytes = V * D * tok_table.dtype.itemsize
    small_table = table_bytes <= _SMALL_TABLE_BYTES

    if small_table:
        # resident table (worst case double-buffered) + pos/out double buffers
        # + one gather scratch tile.
        T = _pick_tokens_per_tile(N, D, 2 * table_bytes, bufs_per_token=5)
    else:
        T = _pick_tokens_per_tile(N, D, 0, bufs_per_token=6)
    N_pad = _round_up(N, T)
    n_tiles = N_pad // T

    # Flatten + pad operands so tiles are decoupled from the sequence length.
    ids = jnp.pad(x.reshape(N).astype(jnp.int32), (0, N_pad - N))
    pos_flat = jnp.pad(jnp.tile(pos_table[:S], (B, 1)), ((0, N_pad - N), (0, 0)))
    gamma2 = gamma.reshape(1, D).astype(jnp.float32)
    beta2 = beta.reshape(1, D).astype(jnp.float32)

    if small_table:
        kernel = functools.partial(
            _embedding_kernel_vmem, tokens_per_tile=T, eps=eps)
        tok_spec = pl.BlockSpec((V, D), lambda i, ids: (0, 0))   # VMEM-resident
        scratch = [pltpu.VMEM((T, D), tok_table.dtype)]
        semantics = ("parallel",)        # shards across TensorCores on v7x
    else:
        kernel = functools.partial(
            _embedding_kernel_hbm, tokens_per_tile=T, eps=eps)
        tok_spec = pl.BlockSpec(memory_space=pl.ANY)             # stays in HBM
        scratch = [pltpu.VMEM((2, T, D), tok_table.dtype),       # double buffer
                   pltpu.SemaphoreType.DMA((2,))]
        semantics = ("arbitrary",)       # cross-step prefetch needs in-order grid

    out_flat = pl.pallas_call(
        kernel,
        out_shape=jax.ShapeDtypeStruct((N_pad, D), jnp.float32),
        grid_spec=pltpu.PrefetchScalarGridSpec(
            num_scalar_prefetch=1,                              # ids -> SMEM
            grid=(n_tiles,),
            in_specs=[
                tok_spec,                                       # token table
                pl.BlockSpec((T, D), lambda i, ids: (i, 0)),    # pos rows
                pl.BlockSpec((1, D), lambda i, ids: (0, 0)),    # gamma
                pl.BlockSpec((1, D), lambda i, ids: (0, 0)),    # beta
            ],
            out_specs=pl.BlockSpec((T, D), lambda i, ids: (i, 0)),
            scratch_shapes=scratch,
        ),
        compiler_params=pltpu.CompilerParams(
            dimension_semantics=semantics,
            vmem_limit_bytes=32 * 1024 * 1024,
        ),
    )(ids, tok_table, pos_flat, gamma2, beta2)

    return out_flat[:N].reshape(B, S, D)


def embedding_ref(x, tok_table, pos_table, gamma, beta, eps=_LN_EPS):
    """Pure-JAX reference for correctness checking."""
    S = x.shape[1]
    emb = tok_table[x] + pos_table[jnp.arange(S)][None, :, :]
    mean = jnp.mean(emb, axis=-1, keepdims=True)
    var = jnp.mean((emb - mean) ** 2, axis=-1, keepdims=True)
    return (emb - mean) / jnp.sqrt(var + eps) * gamma + beta


if __name__ == "__main__":
    # Small shapes consistent with the module's forward.
    vocab_size, d_model, max_len = 64, 32, 16
    B, S = 2, 8

    key = jax.random.PRNGKey(0)
    k_x, k_tok, k_pos = jax.random.split(key, 3)

    x = jax.random.randint(k_x, (B, S), 0, vocab_size, dtype=jnp.int32)
    # nn.Embedding default init: N(0, 1); nn.LayerNorm: gamma=1, beta=0.
    tok_table = jax.random.normal(k_tok, (vocab_size, d_model), dtype=jnp.float32)
    pos_table = jax.random.normal(k_pos, (max_len, d_model), dtype=jnp.float32)
    gamma = jnp.ones((d_model,), dtype=jnp.float32)
    beta = jnp.zeros((d_model,), dtype=jnp.float32)

    out = embedding_forward(x, tok_table, pos_table, gamma, beta)
    out = jax.block_until_ready(out)

    ref = embedding_ref(x, tok_table, pos_table, gamma, beta)
    assert out.shape == (B, S, d_model)
    assert jnp.allclose(out, ref, atol=1e-4, rtol=1e-4), "mismatch vs reference"

    print("KERNEL_OK")
</pallas_src>

<mosaic_0001>
module attributes {stable_mosaic.version = 11 : i64} {
  func.func @_embedding_kernel_vmem(%arg0: i32, %arg1: memref<16xi32, #tpu.memory_space<smem>>, %arg2: memref<64x32xf32, #tpu.memory_space<vmem>>, %arg3: memref<16x32xf32, #tpu.memory_space<vmem>>, %arg4: memref<1x32xf32, #tpu.memory_space<vmem>>, %arg5: memref<1x32xf32, #tpu.memory_space<vmem>>, %arg6: memref<16x32xf32, #tpu.memory_space<vmem>>, %arg7: memref<16x32xf32, #tpu.memory_space<vmem>>) attributes {dimension_semantics = [#tpu.dimension_semantics<parallel>], iteration_bounds = array<i64: 1>, scalar_prefetch = 1 : i64, scratch_operands = 1 : i64, tpu.core_type = #tpu.core_type<tc>, window_params = [{pipeline_mode = #tpu.pipeline_mode<synchronous>, transform_indices = @transform_0, window_bounds = array<i64: 64, 32>}, {transform_indices = @transform_1, window_bounds = array<i64: 16, 32>}, {pipeline_mode = #tpu.pipeline_mode<synchronous>, transform_indices = @transform_2, window_bounds = array<i64: 1, 32>}, {pipeline_mode = #tpu.pipeline_mode<synchronous>, transform_indices = @transform_3, window_bounds = array<i64: 1, 32>}, {transform_indices = @transform_4, window_bounds = array<i64: 16, 32>}]} {
    %c16_i32 = arith.constant 16 : i32
    %0 = arith.muli %arg0, %c16_i32 : i32
    %c0_i32 = arith.constant 0 : i32
    %c16_i32_0 = arith.constant 16 : i32
    %1 = arith.addi %c0_i32, %c16_i32_0 : i32
    %c1_i32 = arith.constant 1 : i32
    scf.for %arg8 = %c0_i32 to %1 step %c1_i32  : i32 {
      %28 = arith.addi %0, %arg8 : i32
      %29 = arith.index_cast %28 : i32 to index
      %30 = memref.load %arg1[%29] : memref<16xi32, #tpu.memory_space<smem>>
      %31 = arith.index_cast %30 : i32 to index
      %c0_15 = arith.constant 0 : index
      %32 = vector.load %arg2[%31, %c0_15] : memref<64x32xf32, #tpu.memory_space<vmem>>, vector<1x32xf32>
      %33 = arith.index_cast %arg8 : i32 to index
      %c0_16 = arith.constant 0 : index
      %34 = vector.load %arg7[%33, %c0_16] : memref<16x32xf32, #tpu.memory_space<vmem>>, vector<1x32xf32>
      tpu.vector_store %arg7[%33, %c0_16], %32 {strides = array<i32>} : memref<16x32xf32, #tpu.memory_space<vmem>>, vector<1x32xf32>,
    }
    %c16_i32_1 = arith.constant 16 : i32
    %c0 = arith.constant 0 : index
    %c0_2 = arith.constant 0 : index
    %2 = vector.load %arg7[%c0, %c0_2] : memref<16x32xf32, #tpu.memory_space<vmem>>, vector<16x32xf32>
    %c0_3 = arith.constant 0 : index
    %c0_4 = arith.constant 0 : index
    %3 = vector.load %arg3[%c0_3, %c0_4] : memref<16x32xf32, #tpu.memory_space<vmem>>, vector<16x32xf32>
    %4 = arith.addf %2, %3 : vector<16x32xf32>
    %cst = arith.constant dense<0.000000e+00> : vector<16xf32>
    %5 = vector.multi_reduction <add>, %4, %cst [1] : vector<16x32xf32> to vector<16xf32>
    %6 = vector.shape_cast %5 : vector<16xf32> to vector<16x1xf32>
    %cst_5 = arith.constant 3.200000e+01 : f32
    %7 = vector.broadcast %cst_5 : f32 to vector<16x1xf32>
    %8 = arith.divf %6, %7 : vector<16x1xf32>
    %9 = vector.broadcast %8 : vector<16x1xf32> to vector<16x32xf32>
    %10 = arith.subf %4, %9 : vector<16x32xf32>
    %11 = arith.mulf %10, %10 : vector<16x32xf32>
    %cst_6 = arith.constant dense<0.000000e+00> : vector<16xf32>
    %12 = vector.multi_reduction <add>, %11, %cst_6 [1] : vector<16x32xf32> to vector<16xf32>
    %13 = vector.shape_cast %12 : vector<16xf32> to vector<16x1xf32>
    %cst_7 = arith.constant 3.200000e+01 : f32
    %14 = vector.broadcast %cst_7 : f32 to vector<16x1xf32>
    %15 = arith.divf %13, %14 : vector<16x1xf32>
    %cst_8 = arith.constant 9.99999974E-6 : f32
    %16 = vector.broadcast %cst_8 : f32 to vector<16x1xf32>
    %17 = arith.addf %15, %16 : vector<16x1xf32>
    %18 = math.rsqrt %17 : vector<16x1xf32>
    %19 = vector.broadcast %18 : vector<16x1xf32> to vector<16x32xf32>
    %20 = arith.mulf %10, %19 : vector<16x32xf32>
    %c0_9 = arith.constant 0 : index
    %c0_10 = arith.constant 0 : index
    %21 = vector.load %arg4[%c0_9, %c0_10] : memref<1x32xf32, #tpu.memory_space<vmem>>, vector<1x32xf32>
    %22 = vector.broadcast %21 : vector<1x32xf32> to vector<16x32xf32>
    %23 = arith.mulf %20, %22 : vector<16x32xf32>
    %c0_11 = arith.constant 0 : index
    %c0_12 = arith.constant 0 : index
    %24 = vector.load %arg5[%c0_11, %c0_12] : memref<1x32xf32, #tpu.memory_space<vmem>>, vector<1x32xf32>
    %25 = vector.broadcast %24 : vector<1x32xf32> to vector<16x32xf32>
    %26 = arith.addf %23, %25 : vector<16x32xf32>
    %c0_13 = arith.constant 0 : index
    %c0_14 = arith.constant 0 : index
    %27 = vector.load %arg6[%c0_13, %c0_14] : memref<16x32xf32, #tpu.memory_space<vmem>>, vector<16x32xf32>
    tpu.vector_store %arg6[%c0_13, %c0_14], %26 {strides = array<i32>} : memref<16x32xf32, #tpu.memory_space<vmem>>, vector<16x32xf32>,
    return
  }
  func.func @transform_0(%arg0: i32, %arg1: memref<16xi32, #tpu.memory_space<smem>>) -> (i32, i32) {
    %c0_i32 = arith.constant 0 : i32
    %c0_i32_0 = arith.constant 0 : i32
    %c0_i32_1 = arith.constant 0 : i32
    return %c0_i32, %c0_i32_0 : i32, i32
  }
  func.func @transform_1(%arg0: i32, %arg1: memref<16xi32, #tpu.memory_space<smem>>) -> (i32, i32) {
    %c0_i32 = arith.constant 0 : i32
    %c0_i32_0 = arith.constant 0 : i32
    return %arg0, %c0_i32 : i32, i32
  }
  func.func @transform_2(%arg0: i32, %arg1: memref<16xi32, #tpu.memory_space<smem>>) -> (i32, i32) {
    %c0_i32 = arith.constant 0 : i32
    %c0_i32_0 = arith.constant 0 : i32
    %c0_i32_1 = arith.constant 0 : i32
    return %c0_i32, %c0_i32_0 : i32, i32
  }
  func.func @transform_3(%arg0: i32, %arg1: memref<16xi32, #tpu.memory_space<smem>>) -> (i32, i32) {
    %c0_i32 = arith.constant 0 : i32
    %c0_i32_0 = arith.constant 0 : i32
    %c0_i32_1 = arith.constant 0 : i32
    return %c0_i32, %c0_i32_0 : i32, i32
  }
  func.func @transform_4(%arg0: i32, %arg1: memref<16xi32, #tpu.memory_space<smem>>) -> (i32, i32) {
    %c0_i32 = arith.constant 0 : i32
    %c0_i32_0 = arith.constant 0 : i32
    return %arg0, %c0_i32 : i32, i32
  }
}

</mosaic_0001>

<llo_original>
// kernel: tpu_custom_call.1
$region0: #{tpu_custom_call.1}
  #allocation0 [shape = 'u32[]', space=smem, size = 0x4, offset = 0x4, fixed_abs, tag = 'smem constant byte address 0x4 - core index']
  #allocation1 [shape = 'u32[72,128]{1,0:T(1,128)}', space=vmem, size = 0x9000, scoped, tag = 'internal scratch']
  #allocation2 [shape = 'f32[16,32]{1,0:T(8,128)}', space=vmem, size = 0x2000, scoped, tag = 'scratch operand']
  #allocation3 [shape = 's32[1]{0}', space=sflag, size = 0x4, scoped, tag = 'scoped memory for tpu_custom_call.1']
  #allocation4 [shape = 'u8[512]{0}', space=smem, size = 0x200, scoped, tag = 'prefetched SMEM operand 0']
  %s0 = inlined_call_operand.vmem [shape: s32[16], index: 0, kind: input, shape index: {}]
  %s1 = inlined_call_operand.vmem [shape: f32[64,32], index: 1, kind: input, shape index: {}]
  %s2 = inlined_call_operand.vmem [shape: f32[16,32], index: 2, kind: input, shape index: {}]
  %s3 = inlined_call_operand.vmem [shape: f32[1,32], index: 3, kind: input, shape index: {}]
  %s4 = inlined_call_operand.vmem [shape: f32[1,32], index: 4, kind: input, shape index: {}]
  %s5 = inlined_call_operand.hbm [shape: f32[16,32], index: 5, kind: output, shape index: {}]
  %s6 = sld [smem:[#allocation0]]
  $region33: #{tpu_custom_call.1} parent=0
    _
  %s8 = ssub.s32 1, %s6
  %s9 = scalar_select 0, %s8, %s6
  %s11 = sshll.u32 %s0, 4
  %s12 = int_to_ptr.vmem [resolvable:$true] %s11
  %14 = dma.vmem_to_smem %s12, 16, [#allocation4], [#allocation3]
  %16 = dma.done [#allocation3], 16
  %17 = sfence
  $region1: #{tpu_custom_call.1} parent=0
    #allocation5 [shape = 'u8[8192]{0}', space=vmem, size = 0x2000, scoped, tag = 'output window, operand 0, single buffered']
    #allocation6 [shape = 's32[1]{0}', space=sflag, size = 0x4, scoped, tag = 'scoped memory for tpu_custom_call.1']
    %18 = vsyncpa [#allocation6], 0
    // Predicated region
    $region2: #{tpu_custom_call.1} parent=1 // pred_check
      _
    $region3: #{tpu_custom_call.1} parent=1 // pred_check_branch
      %20 = sbr.rel (0) target = $region5
    $region4: #{tpu_custom_call.1} parent=1 // pred_region
      _
    $region5: #{tpu_custom_call.1} parent=1 // pred_fallthru
      _
    // Predicated region
    $region6: #{tpu_custom_call.1} parent=1 // pred_check
      _
    $region7: #{tpu_custom_call.1} parent=1 // pred_check_branch
      %22 = sbr.rel (0) target = $region9
    $region8: #{tpu_custom_call.1} parent=1 // pred_region
      _
    $region9: #{tpu_custom_call.1} parent=1 // pred_fallthru
      _
    // Predicated region
    $region10: #{tpu_custom_call.1} parent=1 // pred_check
      _
    $region11: #{tpu_custom_call.1} parent=1 // pred_check_branch
      %24 = sbr.rel (0) target = $region13
    $region12: #{tpu_custom_call.1} parent=1 // pred_region
      _
    $region13: #{tpu_custom_call.1} parent=1 // pred_fallthru
      _
    // Predicated region
    $region14: #{tpu_custom_call.1} parent=1 // pred_check
      _
    $region15: #{tpu_custom_call.1} parent=1 // pred_check_branch
      %26 = sbr.rel (0) target = $region17
    $region16: #{tpu_custom_call.1} parent=1 // pred_region
      _
    $region17: #{tpu_custom_call.1} parent=1 // pred_fallthru
      _
    %s27 = smul.u32 0, 16
    loop: start=0, step=1, limit=16
    $region18: #{tpu_custom_call.1} parent=1 // loop_pre_header
      _
    $region19: #{tpu_custom_call.1} parent=1 // loop_header
      %s29 = sphi 0, %s33
      %p30 = scmp.ge.s32.totalorder %s29, 16
    $region20: #{tpu_custom_call.1} parent=1 // loop_header_branch
      %32 = sbr.rel (%p30) target = $region24
    $region21: #{tpu_custom_call.1} parent=1 // loop_body
      %s34 = sadd.s32 %s27, %s29
      %s35 = sld [smem:[#allocation4 + %s34]]
      %s36 = scalar_lea.vmem %s1, %s35
      %v37 = vld [vmem:[%s36] sm:$0x1]
      %s38 = scalar_lea.vmem [#allocation2], %s29
      %vm39 = vcmask 253952
      %40 = vst.msk [vmem:[%s38] sm:$0x1] %vm39, %v37
    $region22: #{tpu_custom_call.1} parent=1 // loop_footer
      %s33 = sadd.s32 1, %s29
    $region23: #{tpu_custom_call.1} parent=1 // loop_footer_branch
      %28 = sbr.rel target = $region19
    $region24: #{tpu_custom_call.1} parent=1 // loop_exit
      _
    %v41 = vld [vmem:[#allocation2] sm:$0xff]
    %v42 = vld [vmem:[#allocation2 + $0x8] sm:$0xff]
    %v43 = vld [vmem:[%s2] sm:$0xff]
    %v44 = vld [vmem:[%s2 + $0x8] sm:$0xff]
    %v45 = vadd.f32 %v41, %v43
    %v46 = vadd.f32 %v42, %v44
    %vm47 = vcmask 261120
    %v48 = vsel %vm47, %v45, 0.0
    %49 = vadd.xlane.f32.xlu0 %v48
    %v50 = vpop.xlane.xlu0 %49
    %v51 = vsel %vm47, %v46, 0.0
    %52 = vadd.xlane.f32.xlu0 %v51
    %v53 = vpop.xlane.xlu0 %52
    %v54 = vrcp.pop 32.0
    %v55 = vmul.f32 32.0, %v54
    %v56 = vsub.f32 1.0, %v55
    %v57 = vmul.f32 %v54, %v56
    %v58 = vadd.f32 %v54, %v57
    %vm59 = vweird.f32 %v54
    %v60 = vsel %vm59, %v54, %v58
    %v61 = vmul.f32 %v50, %v60
    %v62 = vmul.f32 %v53, %v60
    %v63 = vsub.f32 %v45, %v61
    %v64 = vsub.f32 %v46, %v62
    %v65 = vmul.f32 %v63, %v63
    %v66 = vmul.f32 %v64, %v64
    %v67 = vsel %vm47, %v65, 0.0
    %68 = vadd.xlane.f32.xlu0 %v67
    %v69 = vpop.xlane.xlu0 %68
    %v70 = vsel %vm47, %v66, 0.0
    %71 = vadd.xlane.f32.xlu0 %v70
    %v72 = vpop.xlane.xlu0 %71
    %v73 = vmul.f32 %v69, %v60
    %v74 = vmul.f32 %v72, %v60
    %v75 = vadd.f32 %v73, 1e-05
    %v76 = vadd.f32 %v74, 1e-05
    %v77 = vrsqrt.pop %v75
    %v78 = vmul.f32 %v77, %v75
    %v79 = vmul.f32 %v78, %v77
    %v80 = vmul.f32 0.5, %v79
    %v81 = vsub.f32 1.5, %v80
    %v82 = vmul.f32 %v77, %v81
    %vm83 = vweird.f32 %v75
    %vm84 = vweird.f32 %v77
    %vm85 = vmor %vm83, %vm84
    %v86 = vsel %vm85, %v77, %v82
    %v87 = vrsqrt.pop %v76
    %v88 = vmul.f32 %v87, %v76
    %v89 = vmul.f32 %v88, %v87
    %v90 = vmul.f32 0.5, %v89
    %v91 = vsub.f32 1.5, %v90
    %v92 = vmul.f32 %v87, %v91
    %vm93 = vweird.f32 %v76
    %vm94 = vweird.f32 %v87
    %vm95 = vmor %vm93, %vm94
    %v96 = vsel %vm95, %v87, %v92
    %v97 = vmul.f32 %v63, %v86
    %v98 = vmul.f32 %v64, %v96
    %v99 = vld [vmem:[%s3] sm:$0x1]
    %v101 = vperm.slane %v99, 0
    %v103 = vmul.f32 %v97, %v101
    %v104 = vmul.f32 %v98, %v101
    %v105 = vld [vmem:[%s4] sm:$0x1]
    %v107 = vperm.slane %v105, 0
    %v109 = vadd.f32 %v103, %v107
    %v110 = vadd.f32 %v104, %v107
    %111 = vst.msk [vmem:[#allocation5] sm:$0xff] %vm47, %v109
    %112 = vst.msk [vmem:[#allocation5 + $0x8] sm:$0xff] %vm47, %v110
    // Predicated region
    $region25: #{tpu_custom_call.1} parent=1 // pred_check
      _
    $region26: #{tpu_custom_call.1} parent=1 // pred_check_branch
      %114 = sbr.rel (0) target = $region28
    $region27: #{tpu_custom_call.1} parent=1 // pred_region
      %116 = vsyncadd [#allocation6], 0
      %s117 = sshll.u32 [#allocation5], 4
      %s118 = int_to_ptr.vmem [resolvable:$true] %s117
      %s119 = sshll.u32 %s5, 4
      %s120 = int_to_ptr.hbm [resolvable:$true] %s119
      %125 = dma.vmem_to_hbm [thread:$0]  %s118, 256, %s120, [#allocation6], 128, 128, 8
    $region28: #{tpu_custom_call.1} parent=1 // pred_fallthru
      _
    // Predicated region
    $region29: #{tpu_custom_call.1} parent=1 // pred_check
      _
    $region30: #{tpu_custom_call.1} parent=1 // pred_check_branch
      %127 = sbr.rel (0) target = $region32
    $region31: #{tpu_custom_call.1} parent=1 // pred_region
      %129 = dma.done [#allocation6], 256
    $region32: #{tpu_custom_call.1} parent=1 // pred_fallthru
      _
    %130 = vsyncpa [#allocation6], 1

</llo_original>
